<compile_context>
chip_gen: v5e
topology: v5e:2x2
jax: 0.10.0
libtpu: 0.0.40
codegen_flags: <defaults>
</compile_context>

<pallas_src>
import functools

import jax
import jax.numpy as jnp
from jax.experimental import pallas as pl
from jax.experimental.pallas import tpu as pltpu

_LANES = 128
_TARGET_BLOCK_BYTES = 2 * 1024 * 1024   # per-input DMA block (double buffered)
_TARGET_CHUNK_ELEMS = 4096              # in-register working set per chunk
_UNROLL = 8


def _round_up(x, m):
    return ((x + m - 1) // m) * m


def _device_kind():
    try:
        return jax.devices()[0].device_kind.lower()
    except Exception:
        return ""


def _num_core_splits():
    # 2 TensorCores per chip on v4 / v5p / v7x; 1 on v5e / v6e.
    kind = _device_kind()
    return 2 if any(t in kind for t in ("v4", "v5p", "v7")) else 1


def _bf16_vpu_ok():
    # v6e / v7x have a packed bf16 VPU; v5e does not (keep early f32 cast there).
    kind = _device_kind()
    return ("v6" in kind) or ("v7" in kind)


def _block_config(rows, cols, itemsize):
    """Returns (block_rows, chunk_rows) with block_rows % chunk_rows == 0 and
    block_rows <= rows."""
    cols_pad = _round_up(cols, _LANES)              # physical (lane-padded) width
    ch = max(1, _TARGET_CHUNK_ELEMS // cols_pad)
    ch = max(8, (ch // 8) * 8)                      # multiple of 8 sublanes
    if ch >= rows:
        # Tiny input: one full-row block, one chunk, no masking needed.
        return rows, rows
    chunks_per_block = max(1, _TARGET_BLOCK_BYTES // (ch * cols_pad * itemsize))
    block_rows = min(ch * chunks_per_block, (rows // ch) * ch)
    return block_rows, ch


def _bce_sum_kernel(score_ref, target_ref, out_ref, acc_ref, *,
                    chunk_rows, num_blocks, tail_valid_rows, low_precision):
    block_rows, d = score_ref.shape
    c = pl.program_id(0)            # core split ('parallel')
    i = pl.program_id(1)            # reduction step ('arbitrary')
    steps = pl.num_programs(1)
    g = c * steps + i               # global row-block index owned by this step

    # NOTE: init at i==0 / finalize at i==steps-1 relies on the grid iterating
    # the last ('arbitrary') axis fastest within each core -- the standard
    # Pallas accumulator pattern.
    @pl.when(i == 0)
    def _init():
        acc_ref[...] = jnp.zeros_like(acc_ref)

    def chunk_loss(j):
        start = j * chunk_rows
        if chunk_rows % 8 == 0:
            start = pl.multiple_of(start, 8)
        x = score_ref[pl.ds(start, chunk_rows), :]
        y = target_ref[pl.ds(start, chunk_rows), :]
        if low_precision:
            # bf16 VPU (v6e/v7x): relu / mul / abs stay packed; f32 only for
            # the EUP transcendentals and the accumulate.
            pre = (jnp.maximum(x, 0) - x * y).astype(jnp.float32)
            z = -jnp.abs(x).astype(jnp.float32)
        else:
            xf = x.astype(jnp.float32)
            yf = y.astype(jnp.float32)
            pre = jnp.maximum(xf, 0.0) - xf * yf
            z = -jnp.abs(xf)
        # Numerically stable BCEWithLogits: max(x,0) - x*y + log1p(exp(-|x|))
        return pre + jnp.log1p(jnp.exp(z))          # (chunk_rows, d) f32

    def accumulate(n_chunks, masked):
        def body(j, carry):
            loss = chunk_loss(j)
            if masked:
                # Block-local row index -> no global int32 overflow risk.
                rows = jax.lax.broadcasted_iota(jnp.int32, (chunk_rows, d), 0)
                loss = jnp.where(rows + j * chunk_rows < tail_valid_rows,
                                 loss, 0.0)
            acc_ref[...] += loss                    # VPU-only vreg adds
            return carry
        jax.lax.fori_loop(0, n_chunks, body, 0, unroll=min(_UNROLL, n_chunks))

    full_chunks = block_rows // chunk_rows
    tail_chunks = pl.cdiv(tail_valid_rows, chunk_rows)
    needs_mask = tail_valid_rows != block_rows      # static

    if needs_mask:
        # Mask arithmetic only ever runs for the single (partial) tail block.
        @pl.when(g < num_blocks - 1)
        def _full():
            accumulate(full_chunks, masked=False)

        @pl.when(g == num_blocks - 1)
        def _tail():
            accumulate(tail_chunks, masked=True)
    else:
        # g >= num_blocks happens only for clamped over-coverage steps -> skip.
        @pl.when(g < num_blocks)
        def _full():
            accumulate(full_chunks, masked=False)

    @pl.when(i == steps - 1)
    def _finalize():
        # Single cross-lane/sublane reduce + SMEM scalar store per core.
        out_ref[0, 0] = jnp.sum(acc_ref[...])


@jax.jit
def cross_entropy_loss(score, target):
    """Pallas equivalent of CrossEntropyLoss.forward(score, target):
    BCEWithLogitsLoss(reduction='sum')(score, target), returned as f32 scalar."""
    assert score.shape == target.shape, "score/target must have the same shape"
    n = score.size
    if n == 0:
        return jnp.float32(0.0)

    # ---- shape normalisation without materialising padded copies ----
    if score.ndim >= 2:
        d = score.shape[-1]
        r = n // d
        score2 = score.reshape(r, d)        # leading-dim collapse only
        target2 = target.reshape(r, d)
    elif n % _LANES == 0:
        r, d = n // _LANES, _LANES
        score2 = score.reshape(r, d)
        target2 = target.reshape(r, d)
    else:
        # TODO(synk): rare fallback (1-D, not lane-aligned) still pads (1 copy).
        # Score padded with -100, target with 0 -> each padded element adds
        # exactly 0 loss, so no in-kernel masking of this padding is needed.
        pad = _LANES - (n % _LANES)
        score2 = jnp.pad(score, (0, pad), constant_values=-100.0).reshape(-1, _LANES)
        target2 = jnp.pad(target, (0, pad), constant_values=0).reshape(-1, _LANES)
        r, d = score2.shape

    itemsize = max(score2.dtype.itemsize, target2.dtype.itemsize)
    block_rows, chunk_rows = _block_config(r, d, itemsize)
    num_blocks = pl.cdiv(r, block_rows)
    tail_valid_rows = r - (num_blocks - 1) * block_rows

    splits = min(_num_core_splits(), num_blocks)
    steps = pl.cdiv(num_blocks, splits)

    low_precision = (_bf16_vpu_ok()
                     and score2.dtype == jnp.bfloat16
                     and target2.dtype == jnp.bfloat16)

    kernel = functools.partial(
        _bce_sum_kernel,
        chunk_rows=chunk_rows,
        num_blocks=num_blocks,
        tail_valid_rows=tail_valid_rows,
        low_precision=low_precision,
    )

    def block_index(c, i):
        # Clamp so per-core over-coverage (splits not dividing num_blocks)
        # never issues an out-of-bounds DMA; the body skips those steps.
        return (jnp.minimum(c * steps + i, num_blocks - 1), 0)

    # If DMA becomes exposed on v7x, add pipeline_mode=pl.Buffered(3) here
    # (ample VMEM headroom at this block size).
    in_spec = pl.BlockSpec((block_rows, d), block_index)

    bytes_accessed = (n * (score2.dtype.itemsize + target2.dtype.itemsize)
                      + splits * 4)
    cost = pl.CostEstimate(flops=6 * n, transcendentals=2 * n,
                           bytes_accessed=bytes_accessed)

    partial = pl.pallas_call(
        kernel,
        out_shape=jax.ShapeDtypeStruct((splits, 1), jnp.float32),
        grid_spec=pltpu.PrefetchScalarGridSpec(
            num_scalar_prefetch=0,
            grid=(splits, steps),
            in_specs=[in_spec, in_spec],
            out_specs=pl.BlockSpec((1, 1), lambda c, i: (c, 0),
                                   memory_space=pltpu.SMEM),
            scratch_shapes=[pltpu.VMEM((chunk_rows, d), jnp.float32)],
        ),
        compiler_params=pltpu.CompilerParams(
            dimension_semantics=("parallel", "arbitrary")),
        cost_estimate=cost,
    )(score2, target2)

    return jnp.sum(partial)


def _reference(score, target):
    x = jnp.asarray(score, jnp.float32).reshape(-1)
    y = jnp.asarray(target, jnp.float32).reshape(-1)
    return jnp.sum(jnp.maximum(x, 0.0) - x * y + jnp.log1p(jnp.exp(-jnp.abs(x))))


if __name__ == "__main__":
    key = jax.random.PRNGKey(0)
    k1, k2, k3, k4, k5, k6, k7, k8 = jax.random.split(key, 8)

    # 1) Small 1-D f32 ranking list (lane-aligned -> zero-copy reshape path).
    s1 = jax.random.normal(k1, (256,), dtype=jnp.float32) * 2.0
    t1 = (jax.random.uniform(k2, (256,)) > 0.5).astype(jnp.float32)
    out1 = cross_entropy_loss(s1, t1)
    jax.block_until_ready(out1)
    ref1 = _reference(s1, t1)
    assert jnp.allclose(out1, ref1, rtol=1e-4, atol=1e-2), (out1, ref1)

    # 2) 2-D bf16 input: zero-copy row tiling, multi-block reduction axis,
    #    masked tail block, bf16-VPU path on v6e/v7x.
    s2 = (jax.random.normal(k3, (300, 800), dtype=jnp.float32) * 2.0).astype(jnp.bfloat16)
    t2 = (jax.random.uniform(k4, (300, 800)) > 0.5).astype(jnp.bfloat16)
    out2 = cross_entropy_loss(s2, t2)
    jax.block_until_ready(out2)
    ref2 = _reference(s2, t2)
    assert jnp.allclose(out2, ref2, rtol=5e-4, atol=1.0), (out2, ref2)

    # 3) 2-D f32 with a ragged row tail (exercises the masked tail block).
    s3 = jax.random.normal(k5, (100, 256), dtype=jnp.float32)
    t3 = (jax.random.uniform(k6, (100, 256)) > 0.5).astype(jnp.float32)
    out3 = cross_entropy_loss(s3, t3)
    jax.block_until_ready(out3)
    ref3 = _reference(s3, t3)
    assert jnp.allclose(out3, ref3, rtol=1e-4, atol=1e-1), (out3, ref3)

    # 4) 1-D, not lane-aligned (rare fallback path with -100 / 0 padding).
    s4 = jax.random.normal(k7, (301,), dtype=jnp.float32)
    t4 = (jax.random.uniform(k8, (301,)) > 0.5).astype(jnp.float32)
    out4 = cross_entropy_loss(s4, t4)
    jax.block_until_ready(out4)
    ref4 = _reference(s4, t4)
    assert jnp.allclose(out4, ref4, rtol=1e-4, atol=1e-2), (out4, ref4)

    # TODO(synk): forward_per_list uses data-dependent Python-side splitting
    # (length.tolist()); it is host-side glue around this kernel, not ported.

    print("KERNEL_OK")
</pallas_src>

<mosaic_0001>
module attributes {stable_mosaic.version = 11 : i64} {
  func.func @_bce_sum_kernel(%arg0: i32, %arg1: i32, %arg2: memref<2x128xf32, #tpu.memory_space<vmem>>, %arg3: memref<2x128xf32, #tpu.memory_space<vmem>>, %arg4: memref<1x1xf32, #tpu.memory_space<smem>>, %arg5: memref<2x128xf32, #tpu.memory_space<vmem>>) attributes {dimension_semantics = [#tpu.dimension_semantics<parallel>, #tpu.dimension_semantics<arbitrary>], iteration_bounds = array<i64: 1, 1>, scalar_prefetch = 0 : i64, scratch_operands = 1 : i64, tpu.core_type = #tpu.core_type<tc>, window_params = [{transform_indices = @transform_0, window_bounds = array<i64: 2, 128>}, {transform_indices = @transform_1, window_bounds = array<i64: 2, 128>}, {transform_indices = @transform_2, window_bounds = array<i64: 1, 1>}]} {
    %c1_i32 = arith.constant 1 : i32
    %0 = arith.muli %arg0, %c1_i32 : i32
    %1 = arith.addi %0, %arg1 : i32
    %c0_i32 = arith.constant 0 : i32
    %2 = arith.cmpi eq, %arg1, %c0_i32 : i32
    %3 = arith.extui %2 : i1 to i32
    %c0_i32_0 = arith.constant 0 : i32
    %4 = arith.cmpi ne, %3, %c0_i32_0 : i32
    scf.if %4 {
      %cst = arith.constant 0.000000e+00 : f32
      %11 = vector.broadcast %cst : f32 to vector<2x128xf32>
      %c0 = arith.constant 0 : index
      %c0_5 = arith.constant 0 : index
      %12 = vector.load %arg5[%c0, %c0_5] : memref<2x128xf32, #tpu.memory_space<vmem>>, vector<2x128xf32>
      tpu.vector_store %arg5[%c0, %c0_5], %11 {strides = array<i32>} : memref<2x128xf32, #tpu.memory_space<vmem>>, vector<2x128xf32>,
    } else {
    }
    %c1_i32_1 = arith.constant 1 : i32
    %5 = arith.cmpi slt, %1, %c1_i32_1 : i32
    %6 = arith.extui %5 : i1 to i32
    %c0_i32_2 = arith.constant 0 : i32
    %7 = arith.cmpi ne, %6, %c0_i32_2 : i32
    scf.if %7 {
      %c0_i32_5 = arith.constant 0 : i32
      %c2_i32 = arith.constant 2 : i32
      %11 = arith.muli %c0_i32_5, %c2_i32 : i32
      %12 = arith.index_cast %11 : i32 to index
      %c0 = arith.constant 0 : index
      %13 = vector.load %arg2[%12, %c0] : memref<2x128xf32, #tpu.memory_space<vmem>>, vector<2x128xf32>
      %14 = arith.index_cast %11 : i32 to index
      %c0_6 = arith.constant 0 : index
      %15 = vector.load %arg3[%14, %c0_6] : memref<2x128xf32, #tpu.memory_space<vmem>>, vector<2x128xf32>
      %cst = arith.constant 0.000000e+00 : f32
      %16 = vector.broadcast %cst : f32 to vector<2x128xf32>
      %17 = arith.maximumf %13, %16 : vector<2x128xf32>
      %18 = arith.mulf %13, %15 : vector<2x128xf32>
      %19 = arith.subf %17, %18 : vector<2x128xf32>
      %20 = math.absf %13 : vector<2x128xf32>
      %cst_7 = arith.constant 0.000000e+00 : f32
      %21 = vector.broadcast %cst_7 : f32 to vector<2x128xf32>
      %22 = arith.subf %21, %20 : vector<2x128xf32>
      %23 = math.exp %22 : vector<2x128xf32>
      %24 = math.log1p %23 : vector<2x128xf32>
      %25 = arith.addf %19, %24 : vector<2x128xf32>
      %c0_8 = arith.constant 0 : index
      %c0_9 = arith.constant 0 : index
      %26 = vector.load %arg5[%c0_8, %c0_9] : memref<2x128xf32, #tpu.memory_space<vmem>>, vector<2x128xf32>
      %27 = arith.addf %26, %25 : vector<2x128xf32>
      %c0_10 = arith.constant 0 : index
      %c0_11 = arith.constant 0 : index
      %28 = vector.load %arg5[%c0_10, %c0_11] : memref<2x128xf32, #tpu.memory_space<vmem>>, vector<2x128xf32>
      tpu.vector_store %arg5[%c0_10, %c0_11], %27 {strides = array<i32>} : memref<2x128xf32, #tpu.memory_space<vmem>>, vector<2x128xf32>,
      %c1_i32_12 = arith.constant 1 : i32
    } else {
    }
    %c0_i32_3 = arith.constant 0 : i32
    %8 = arith.cmpi eq, %arg1, %c0_i32_3 : i32
    %9 = arith.extui %8 : i1 to i32
    %c0_i32_4 = arith.constant 0 : i32
    %10 = arith.cmpi ne, %9, %c0_i32_4 : i32
    scf.if %10 {
      %c0 = arith.constant 0 : index
      %c0_5 = arith.constant 0 : index
      %11 = vector.load %arg5[%c0, %c0_5] : memref<2x128xf32, #tpu.memory_space<vmem>>, vector<2x128xf32>
      %12 = vector.shape_cast %11 : vector<2x128xf32> to vector<1x2x128xf32>
      %cst = arith.constant dense<0.000000e+00> : vector<1xf32>
      %13 = vector.multi_reduction <add>, %12, %cst [1, 2] : vector<1x2x128xf32> to vector<1xf32>
      %14 = vector.shape_cast %13 : vector<1xf32> to vector<1x1x1xf32>
      %15 = vector.extract %14[0, 0, 0] : f32 from vector<1x1x1xf32>
      %c0_6 = arith.constant 0 : index
      %c0_7 = arith.constant 0 : index
      %16 = memref.load %arg4[%c0_6, %c0_7] : memref<1x1xf32, #tpu.memory_space<smem>>
      memref.store %15, %arg4[%c0_6, %c0_7] : memref<1x1xf32, #tpu.memory_space<smem>>
    } else {
    }
    return
  }
  func.func @transform_0(%arg0: i32, %arg1: i32) -> (i32, i32) {
    %c1_i32 = arith.constant 1 : i32
    %0 = arith.muli %arg0, %c1_i32 : i32
    %1 = arith.addi %0, %arg1 : i32
    %c0_i32 = arith.constant 0 : i32
    %2 = arith.minsi %1, %c0_i32 : i32
    %c0_i32_0 = arith.constant 0 : i32
    %c0_i32_1 = arith.constant 0 : i32
    return %2, %c0_i32_0 : i32, i32
  }
  func.func @transform_1(%arg0: i32, %arg1: i32) -> (i32, i32) {
    %c1_i32 = arith.constant 1 : i32
    %0 = arith.muli %arg0, %c1_i32 : i32
    %1 = arith.addi %0, %arg1 : i32
    %c0_i32 = arith.constant 0 : i32
    %2 = arith.minsi %1, %c0_i32 : i32
    %c0_i32_0 = arith.constant 0 : i32
    %c0_i32_1 = arith.constant 0 : i32
    return %2, %c0_i32_0 : i32, i32
  }
  func.func @transform_2(%arg0: i32, %arg1: i32) -> (i32, i32) {
    %c0_i32 = arith.constant 0 : i32
    %c0_i32_0 = arith.constant 0 : i32
    return %arg0, %c0_i32 : i32, i32
  }
}

</mosaic_0001>

<llo_original>
// kernel: cross_entropy_loss.1
$region0: #{cross_entropy_loss.1}
  #allocation0 [shape = 'u32[]', space=smem, size = 0x4, offset = 0x4, fixed_abs, tag = 'smem constant byte address 0x4 - core index']
  #allocation1 [shape = 'u32[72,128]{1,0:T(1,128)}', space=vmem, size = 0x9000, scoped, tag = 'internal scratch']
  #allocation2 [shape = 'f32[2,128]{1,0:T(2,128)}', space=vmem, size = 0x400, scoped, tag = 'scratch operand']
  %s0 = inlined_call_operand.hbm [shape: f32[2,128], index: 0, kind: input, shape index: {}]
  %s1 = inlined_call_operand.vmem [shape: f32[2,128], index: 1, kind: input, shape index: {}]
  %s2 = inlined_call_operand.hbm [shape: f32[1,1], index: 2, kind: output, shape index: {}]
  %s3 = sld [smem:[#allocation0]]
  $region34: #{cross_entropy_loss.1} parent=0
    _
  %s5 = ssub.s32 1, %s3
  %s6 = scalar_select 0, %s5, %s3
  $region1: #{cross_entropy_loss.1} parent=0
    #allocation3 [shape = 'u8[1024]{0}', space=vmem, size = 0x400, scoped, tag = 'input window, operand 0, single buffered']
    #allocation4 [shape = 's32[1]{0}', space=sflag, size = 0x4, scoped, tag = 'scoped memory for cross_entropy_loss.1']
    #allocation5 [shape = 's32[1]{0}', space=sflag, size = 0x4, scoped, tag = 'scoped memory for cross_entropy_loss.1']
    #allocation6 [shape = 'u8[512]{0}', space=smem, size = 0x200, scoped, tag = 'output window, operand 0, single buffered']
    %7 = vsyncpa [#allocation4], 0
    %8 = vsyncpa [#allocation5], 0
    // Predicated region
    $region2: #{cross_entropy_loss.1} parent=1 // pred_check
      _
    $region3: #{cross_entropy_loss.1} parent=1 // pred_check_branch
      %10 = sbr.rel (0) target = $region5
    $region4: #{cross_entropy_loss.1} parent=1 // pred_region
      %s11 = sadd.s32 0, 0
      %p12 = scmp.lt.s32.totalorder %s11, 0
      %s13 = scalar_select %p12, %s11, 0
      %15 = vsyncadd [#allocation4], 0
      %s16 = smul.addr %s13, 2
      %s17 = scalar_lea.hbm %s0, %s16
      %s19 = sshll.u32 %s17, 4
      %s20 = int_to_ptr.hbm [resolvable:$true] %s19
      %s21 = sshll.u32 [#allocation3], 4
      %s22 = int_to_ptr.vmem [resolvable:$true] %s21
      %24 = dma.hbm_to_vmem [thread:$0]  %s20, 32, %s22, [#allocation4]
    $region5: #{cross_entropy_loss.1} parent=1 // pred_fallthru
      _
    // Predicated region
    $region6: #{cross_entropy_loss.1} parent=1 // pred_check
      _
    $region7: #{cross_entropy_loss.1} parent=1 // pred_check_branch
      %26 = sbr.rel (0) target = $region9
    $region8: #{cross_entropy_loss.1} parent=1 // pred_region
      %s27 = sadd.s32 0, 0
      %p28 = scmp.lt.s32.totalorder %s27, 0
      %s29 = scalar_select %p28, %s27, 0
      %p30 = scmp.lt.s32.totalorder %s29, 0
      %s31 = scalar_select %p30, %s29, 0
      %s32 = smul.addr %s31, 2
      %s33 = scalar_lea.vmem %s1, %s32
      %s34 = sadd.s32 0, 0
      %p35 = scmp.lt.s32.totalorder %s34, 0
      %s36 = scalar_select %p35, %s34, 0
    $region9: #{cross_entropy_loss.1} parent=1 // pred_fallthru
      _
    // Predicated region
    $region10: #{cross_entropy_loss.1} parent=1 // pred_check
      _
    $region11: #{cross_entropy_loss.1} parent=1 // pred_check_branch
      %38 = sbr.rel (0) target = $region13
    $region12: #{cross_entropy_loss.1} parent=1 // pred_region
      %40 = dma.done [#allocation4], 32
    $region13: #{cross_entropy_loss.1} parent=1 // pred_fallthru
      _
    %s41 = sadd.s32 0, 0
    %p42 = scmp.lt.s32.totalorder %s41, 0
    %s43 = scalar_select %p42, %s41, 0
    %p44 = scmp.lt.s32.totalorder %s43, 0
    %s45 = scalar_select %p44, %s43, 0
    %s46 = smul.addr %s45, 2
    %s47 = scalar_lea.vmem %s1, %s46
    %s48 = sadd.s32 0, 0
    %p49 = scmp.lt.s32.totalorder %s48, 0
    %s50 = scalar_select %p49, %s48, 0
    %s51 = sadd.s32 0, 0
    %p52 = scmp.lt.s32.totalorder %s51, 0
    %s53 = scalar_select %p52, %s51, 0
    %p54 = scmp.lt.s32.totalorder %s53, 0
    %s55 = scalar_select %p54, %s53, 0
    %s56 = smul.addr %s55, 2
    %s57 = scalar_lea.vmem %s1, %s56
    %s58 = sadd.s32 0, 0
    %p59 = scmp.lt.s32.totalorder %s58, 0
    %s60 = scalar_select %p59, %s58, 0
    %s61 = sadd.s32 0, 0
    %p62 = scmp.eq.s32.totalorder 0, 0
    // Predicated region
    $region14: #{cross_entropy_loss.1} parent=1 // pred_check
      %p63 = pneg %p62
    $region15: #{cross_entropy_loss.1} parent=1 // pred_check_branch
      %65 = sbr.rel (%p63) target = $region17
    $region16: #{cross_entropy_loss.1} parent=1 // pred_region
      %66 = vst [vmem:[#allocation2] sm:$0x3] 0.0
    $region17: #{cross_entropy_loss.1} parent=1 // pred_fallthru
      _
    %p67 = scmp.lt.s32.totalorder %s61, 1
    // Predicated region
    $region18: #{cross_entropy_loss.1} parent=1 // pred_check
      %p68 = pneg %p67
    $region19: #{cross_entropy_loss.1} parent=1 // pred_check_branch
      %70 = sbr.rel (%p68) target = $region21
    $region20: #{cross_entropy_loss.1} parent=1 // pred_region
      %v71 = vld [vmem:[#allocation3] sm:$0x3]
      %v72 = vld [vmem:[%s57] sm:$0x3]
      %v73 = vmax.f32 %v71, 0.0
      %v74 = vmul.f32 %v71, %v72
      %v75 = vsub.f32 %v73, %v74
      %v76 = vand.u32 2147483647, %v71
      %v77 = vsub.f32 0.0, %v76
      %v78 = vmul.f32 %v77, 1.442695
      %v79 = vpow.pop %v78
      %v80 = vadd.f32 %v79, 1.0
      %v81 = vlog2.pop %v80
      %v82 = vmul.f32 %v81, 0.6931472
      %v83 = vmul.f32 -0.5, %v79
      %v84 = vadd.f32 %v83, 1.0
      %v85 = vmul.f32 %v84, %v79
      %v86 = vand.u32 2147483647, %v79
      %vm87 = vcmp.lt.f32.partialorder %v86, 0.0004427343
      %v88 = vsel %vm87, %v85, %v82
      %v89 = vadd.f32 %v75, %v88
      %v90 = vld [vmem:[#allocation2] sm:$0x3]
      %v91 = vadd.f32 %v90, %v89
      %92 = vst [vmem:[#allocation2] sm:$0x3] %v91
    $region21: #{cross_entropy_loss.1} parent=1 // pred_fallthru
      _
    // Predicated region
    $region22: #{cross_entropy_loss.1} parent=1 // pred_check
      %p93 = pneg %p62
    $region23: #{cross_entropy_loss.1} parent=1 // pred_check_branch
      %95 = sbr.rel (%p93) target = $region25
    $region24: #{cross_entropy_loss.1} parent=1 // pred_region
      %v96 = vld [vmem:[#allocation2] sm:$0x3]
      %vm97 = vcmask 1041408
      %v98 = vsel %vm97, %v96, 0.0
      %99 = vadd.xlane.f32.xlu0 %v98
      %v100 = vpop.xlane.xlu0 %99
      %v101 = vrot.slane %v100, 4
      %v102 = vadd.f32 %v100, %v101
      %v103 = vrot.slane %v102, 2
      %v104 = vadd.f32 %v102, %v103
      %v105 = vrot.slane %v104, 1
      %v106 = vadd.f32 %v104, %v105
      %s107 = vtos %v106
      %s108 = scalar_lea.smem [#allocation6], 0
      %109 = sst [smem:[%s108]] %s107
    $region25: #{cross_entropy_loss.1} parent=1 // pred_fallthru
      _
    // Predicated region
    $region26: #{cross_entropy_loss.1} parent=1 // pred_check
      _
    $region27: #{cross_entropy_loss.1} parent=1 // pred_check_branch
      %111 = sbr.rel (0) target = $region29
    $region28: #{cross_entropy_loss.1} parent=1 // pred_region
      %113 = vsyncadd [#allocation5], 0
      %s115 = sshll.u32 %s2, 4
      %s116 = int_to_ptr.hbm [resolvable:$true] %s115
      %118 = dma.smem_to_hbm [#allocation6], 16, %s116, [#allocation5]
    $region29: #{cross_entropy_loss.1} parent=1 // pred_fallthru
      _
    // Predicated region
    $region30: #{cross_entropy_loss.1} parent=1 // pred_check
      _
    $region31: #{cross_entropy_loss.1} parent=1 // pred_check_branch
      %120 = sbr.rel (0) target = $region33
    $region32: #{cross_entropy_loss.1} parent=1 // pred_region
      %122 = dma.done [#allocation5], 16
    $region33: #{cross_entropy_loss.1} parent=1 // pred_fallthru
      _
    %123 = sfence
    %124 = vsyncpa [#allocation4], 1
    %125 = vsyncpa [#allocation5], 1

</llo_original>
